<compile_context>
chip_gen: v5e
topology: v5e:2x2
jax: 0.10.0
libtpu: 0.0.40
codegen_flags: <defaults>
</compile_context>

<pallas_src>
import math

import jax
import jax.numpy as jnp
from jax.experimental import pallas as pl
from jax.experimental.pallas import tpu as pltpu

LN_EPS = 1e-5                                # torch.nn.LayerNorm default
_STREAM_BUDGET_BYTES = 24 * 1024 * 1024      # streamed double buffers (x, skip, out)
_VMEM_LIMIT_BYTES = 40 * 1024 * 1024         # scoped VMEM limit (safe on v5e/v6e/v7x)
_MAX_PACK_WIDTH = 512                        # cap on lane-packed super-row width


def _addnorm_simple_kernel(x_ref, s_ref, g_ref, w_ref, b_ref, o_ref):
    # Path for H % 128 == 0 (already lane-dense) or un-packable H (fallback).
    # Blocks: x/s/o (tm, W); g/w/b (1, W) f32.
    x = x_ref[...].astype(jnp.float32)
    s = s_ref[...].astype(jnp.float32)
    y = x + s * g_ref[...]
    mean = jnp.mean(y, axis=-1, keepdims=True)
    c = y - mean
    var = jnp.mean(c * c, axis=-1, keepdims=True)
    inv = jax.lax.rsqrt(var + LN_EPS)
    o_ref[...] = (c * inv * w_ref[...] + b_ref[...]).astype(o_ref.dtype)


def _addnorm_packed_kernel(x_ref, s_ref, g_ref, w_ref, b_ref, seg_ref, o_ref):
    # Lane-packed path: each super-row of width W = P*H (multiple of 128) holds
    # P logical rows.  seg_ref is a (W, W) block-diagonal matrix with value 1/H
    # on the diagonal blocks, so dot(y, seg) gives every lane the MEAN over its
    # own H-wide segment (segmented reduce on the otherwise-idle MXU), keeping
    # the whole kernel lane-dense with unmasked loads/stores.
    x = x_ref[...].astype(jnp.float32)
    s = s_ref[...].astype(jnp.float32)
    y = x + s * g_ref[...]
    seg = seg_ref[...]
    mean = jnp.dot(y, seg, preferred_element_type=jnp.float32,
                   precision=jax.lax.Precision.HIGHEST)
    c = y - mean
    var = jnp.dot(c * c, seg, preferred_element_type=jnp.float32,
                  precision=jax.lax.Precision.HIGHEST)
    inv = jax.lax.rsqrt(var + LN_EPS)
    o_ref[...] = (c * inv * w_ref[...] + b_ref[...]).astype(o_ref.dtype)


def _round_up(a, m):
    return ((a + m - 1) // m) * m


def _pack_factor(h):
    """Logical rows folded into one lane-dense super-row."""
    if h % 128 == 0:
        return 1
    w = h * (128 // math.gcd(h, 128))        # lcm(h, 128)
    if w <= _MAX_PACK_WIDTH:
        return w // h
    return 1  # fallback: block last dim == full H (legal; lanes masked)


def _auto_row_tile(n_rows, width, itemsize):
    """Largest row tile whose streamed double buffers (x, skip, out) fit in
    _STREAM_BUDGET_BYTES while keeping enough grid steps for pipeline overlap
    and megacore sharding (v7x: 2 TensorCores -> prefer >= 8 steps)."""
    sublane = 8 if itemsize >= 4 else 16      # bf16 packs 16 sublanes / vreg
    per_row = 2 * 3 * width * itemsize        # 2 bufs x (x, skip, out)
    tile = max(sublane, _STREAM_BUDGET_BYTES // per_row)
    for min_steps in (8, 4, 2):
        if n_rows >= min_steps * sublane:
            tile = min(tile, _round_up(pl.cdiv(n_rows, min_steps), sublane))
            break
    tile = (tile // sublane) * sublane
    return max(sublane, tile)


def add_norm(x, skip, mask, ln_weight, ln_bias, *, row_tile=None):
    """x, skip: [B, T, H]; mask, ln_weight, ln_bias: [H]."""
    B, T, H = x.shape
    # TODO(synk): TimeDistributedInterpolation resample branch (input_size !=
    # skip_size) not implemented; this config requires skip_size == input_size.
    assert skip.shape == (B, T, H), "skip_size must equal input_size (no resample)"
    out_dtype = x.dtype
    itemsize = jnp.dtype(out_dtype).itemsize
    N = B * T

    P = _pack_factor(H)
    W = P * H

    # Hoisted per-feature parameters (computed once, outside the grid loop).
    gate = jax.nn.sigmoid(mask.astype(jnp.float32)) * 2.0
    g_w = jnp.tile(gate, P).reshape(1, W)
    w_w = jnp.tile(ln_weight.astype(jnp.float32), P).reshape(1, W)
    b_w = jnp.tile(ln_bias.astype(jnp.float32), P).reshape(1, W)

    # Pad only to a multiple of P (at most P-1 rows); the common case (N % P
    # == 0, including P == 1) does no padding and no post-kernel slice at all.
    n_pad_rows = (-N) % P
    x2 = x.reshape(N, H)
    s2 = skip.reshape(N, H)
    if n_pad_rows:
        pad = ((0, n_pad_rows), (0, 0))
        x2 = jnp.pad(x2, pad)
        s2 = jnp.pad(s2, pad)
    n_rows = N + n_pad_rows
    n_super = n_rows // P
    x2 = x2.reshape(n_super, W)
    s2 = s2.reshape(n_super, W)

    if row_tile is None:
        row_tile = _auto_row_tile(n_super, W, itemsize)
    if row_tile >= n_super:
        row_tile = n_super                      # single full block (any row count)
        grid = (1,)
    else:
        # Ragged last block is handled by Pallas: OOB reads are garbage but
        # per-row independent (cannot contaminate valid rows); OOB output rows
        # are masked on writeback.  No host-side pad / slice needed.
        grid = (pl.cdiv(n_super, row_tile),)

    row_spec = pl.BlockSpec((row_tile, W), lambda i: (i, 0))
    vec_spec = pl.BlockSpec((1, W), lambda i: (0, 0))

    flops = 10 * n_super * W
    if P == 1:
        kernel = _addnorm_simple_kernel
        in_specs = [row_spec, row_spec, vec_spec, vec_spec, vec_spec]
        args = (x2, s2, g_w, w_w, b_w)
    else:
        seg_idx = jnp.arange(W) // H
        seg = jnp.where(seg_idx[:, None] == seg_idx[None, :],
                        jnp.float32(1.0 / H), jnp.float32(0.0))
        kernel = _addnorm_packed_kernel
        in_specs = [row_spec, row_spec, vec_spec, vec_spec, vec_spec,
                    pl.BlockSpec((W, W), lambda i: (0, 0))]
        args = (x2, s2, g_w, w_w, b_w, seg)
        flops += 2 * 2 * n_super * W * W        # two segmented-reduce matmuls

    cost = pl.CostEstimate(
        flops=int(flops),
        transcendentals=int(n_rows),            # one rsqrt per row
        bytes_accessed=int(3 * n_rows * H * itemsize))

    out = pl.pallas_call(
        kernel,
        out_shape=jax.ShapeDtypeStruct((n_super, W), out_dtype),
        grid_spec=pltpu.PrefetchScalarGridSpec(
            num_scalar_prefetch=0,
            grid=grid,
            in_specs=in_specs,
            out_specs=row_spec,
        ),
        compiler_params=pltpu.CompilerParams(
            dimension_semantics=("parallel",),
            vmem_limit_bytes=_VMEM_LIMIT_BYTES),
        cost_estimate=cost,
    )(*args)

    out = out.reshape(n_rows, H)
    if n_pad_rows:
        out = out[:N]
    return out.reshape(B, T, H)


def _reference(x, skip, mask, ln_weight, ln_bias):
    skip_g = skip * jax.nn.sigmoid(mask) * 2.0
    y = x + skip_g
    mu = jnp.mean(y, axis=-1, keepdims=True)
    var = jnp.mean((y - mu) ** 2, axis=-1, keepdims=True)
    return (y - mu) * jax.lax.rsqrt(var + LN_EPS) * ln_weight + ln_bias


if __name__ == "__main__":
    key = jax.random.PRNGKey(0)
    kx, ks, km, kw, kb = jax.random.split(key, 5)

    # 1) lane-packed path (H = 32 < 128), small shapes: batch=2, seq=8, hidden=32
    B, T, H = 2, 8, 32
    x = jax.random.normal(kx, (B, T, H), dtype=jnp.float32)
    skip = jax.random.normal(ks, (B, T, H), dtype=jnp.float32)
    mask = 0.1 * jax.random.normal(km, (H,), dtype=jnp.float32)
    ln_weight = 1.0 + 0.05 * jax.random.normal(kw, (H,), dtype=jnp.float32)
    ln_bias = 0.05 * jax.random.normal(kb, (H,), dtype=jnp.float32)

    out = add_norm(x, skip, mask, ln_weight, ln_bias)
    jax.block_until_ready(out)
    ref = _reference(x, skip, mask, ln_weight, ln_bias)
    assert jnp.allclose(out, ref, atol=1e-4, rtol=1e-4), \
        float(jnp.max(jnp.abs(out - ref)))

    # 2) simple (already lane-dense) path: H = 128, multi-step grid
    H2 = 128
    x2 = jax.random.normal(kx, (B, T, H2), dtype=jnp.float32)
    s2 = jax.random.normal(ks, (B, T, H2), dtype=jnp.float32)
    m2 = jnp.zeros((H2,), jnp.float32)
    w2 = jnp.ones((H2,), jnp.float32)
    b2 = jnp.zeros((H2,), jnp.float32)
    out2 = add_norm(x2, s2, m2, w2, b2)
    jax.block_until_ready(out2)
    ref2 = _reference(x2, s2, m2, w2, b2)
    assert jnp.allclose(out2, ref2, atol=1e-4, rtol=1e-4), \
        float(jnp.max(jnp.abs(out2 - ref2)))

    # 3) ragged grid + pad-to-P path: N = 2*101 = 202 rows (not a multiple of
    #    P=4), explicit small row_tile so the last block is partial.
    B3, T3 = 2, 101
    x3 = jax.random.normal(kx, (B3, T3, H), dtype=jnp.float32)
    s3 = jax.random.normal(ks, (B3, T3, H), dtype=jnp.float32)
    out3 = add_norm(x3, s3, mask, ln_weight, ln_bias, row_tile=16)
    jax.block_until_ready(out3)
    ref3 = _reference(x3, s3, mask, ln_weight, ln_bias)
    assert jnp.allclose(out3, ref3, atol=1e-4, rtol=1e-4), \
        float(jnp.max(jnp.abs(out3 - ref3)))

    print("KERNEL_OK")
</pallas_src>

<mosaic_0001>
module attributes {stable_mosaic.version = 11 : i64} {
  func.func @_addnorm_packed_kernel(%arg0: i32, %arg1: memref<4x128xf32, #tpu.memory_space<vmem>>, %arg2: memref<4x128xf32, #tpu.memory_space<vmem>>, %arg3: memref<1x128xf32, #tpu.memory_space<vmem>>, %arg4: memref<1x128xf32, #tpu.memory_space<vmem>>, %arg5: memref<1x128xf32, #tpu.memory_space<vmem>>, %arg6: memref<128x128xf32, #tpu.memory_space<vmem>>, %arg7: memref<4x128xf32, #tpu.memory_space<vmem>>) attributes {dimension_semantics = [#tpu.dimension_semantics<parallel>], iteration_bounds = array<i64: 1>, scalar_prefetch = 0 : i64, scratch_operands = 0 : i64, tpu.core_type = #tpu.core_type<tc>, window_params = [{transform_indices = @transform_0, window_bounds = array<i64: 4, 128>}, {transform_indices = @transform_1, window_bounds = array<i64: 4, 128>}, {pipeline_mode = #tpu.pipeline_mode<synchronous>, transform_indices = @transform_2, window_bounds = array<i64: 1, 128>}, {pipeline_mode = #tpu.pipeline_mode<synchronous>, transform_indices = @transform_3, window_bounds = array<i64: 1, 128>}, {pipeline_mode = #tpu.pipeline_mode<synchronous>, transform_indices = @transform_4, window_bounds = array<i64: 1, 128>}, {pipeline_mode = #tpu.pipeline_mode<synchronous>, transform_indices = @transform_5, window_bounds = array<i64: 128, 128>}, {transform_indices = @transform_6, window_bounds = array<i64: 4, 128>}]} {
    %c0 = arith.constant 0 : index
    %c0_0 = arith.constant 0 : index
    %0 = vector.load %arg1[%c0, %c0_0] : memref<4x128xf32, #tpu.memory_space<vmem>>, vector<4x128xf32>
    %c0_1 = arith.constant 0 : index
    %c0_2 = arith.constant 0 : index
    %1 = vector.load %arg2[%c0_1, %c0_2] : memref<4x128xf32, #tpu.memory_space<vmem>>, vector<4x128xf32>
    %c0_3 = arith.constant 0 : index
    %c0_4 = arith.constant 0 : index
    %2 = vector.load %arg3[%c0_3, %c0_4] : memref<1x128xf32, #tpu.memory_space<vmem>>, vector<1x128xf32>
    %3 = vector.broadcast %2 : vector<1x128xf32> to vector<4x128xf32>
    %4 = arith.mulf %1, %3 : vector<4x128xf32>
    %5 = arith.addf %0, %4 : vector<4x128xf32>
    %c0_5 = arith.constant 0 : index
    %c0_6 = arith.constant 0 : index
    %6 = vector.load %arg6[%c0_5, %c0_6] : memref<128x128xf32, #tpu.memory_space<vmem>>, vector<128x128xf32>
    %cst = arith.constant dense<0.000000e+00> : vector<4x128xf32>
    %7 = tpu.matmul %5, %6, %cst {dimension_numbers = #tpu.dot_dimension_numbers<[1], [0], [0], [1], [0, 0, 1, 1], [], []>, precision = #tpu.contract_precision<fp32>} : vector<4x128xf32>, vector<128x128xf32>, vector<4x128xf32> -> vector<4x128xf32>
    %8 = arith.subf %5, %7 : vector<4x128xf32>
    %9 = arith.mulf %8, %8 : vector<4x128xf32>
    %cst_7 = arith.constant dense<0.000000e+00> : vector<4x128xf32>
    %10 = tpu.matmul %9, %6, %cst_7 {dimension_numbers = #tpu.dot_dimension_numbers<[1], [0], [0], [1], [0, 0, 1, 1], [], []>, precision = #tpu.contract_precision<fp32>} : vector<4x128xf32>, vector<128x128xf32>, vector<4x128xf32> -> vector<4x128xf32>
    %cst_8 = arith.constant 9.99999974E-6 : f32
    %11 = vector.broadcast %cst_8 : f32 to vector<4x128xf32>
    %12 = arith.addf %10, %11 : vector<4x128xf32>
    %13 = math.rsqrt %12 : vector<4x128xf32>
    %14 = arith.mulf %8, %13 : vector<4x128xf32>
    %c0_9 = arith.constant 0 : index
    %c0_10 = arith.constant 0 : index
    %15 = vector.load %arg4[%c0_9, %c0_10] : memref<1x128xf32, #tpu.memory_space<vmem>>, vector<1x128xf32>
    %16 = vector.broadcast %15 : vector<1x128xf32> to vector<4x128xf32>
    %17 = arith.mulf %14, %16 : vector<4x128xf32>
    %c0_11 = arith.constant 0 : index
    %c0_12 = arith.constant 0 : index
    %18 = vector.load %arg5[%c0_11, %c0_12] : memref<1x128xf32, #tpu.memory_space<vmem>>, vector<1x128xf32>
    %19 = vector.broadcast %18 : vector<1x128xf32> to vector<4x128xf32>
    %20 = arith.addf %17, %19 : vector<4x128xf32>
    %c0_13 = arith.constant 0 : index
    %c0_14 = arith.constant 0 : index
    %21 = vector.load %arg7[%c0_13, %c0_14] : memref<4x128xf32, #tpu.memory_space<vmem>>, vector<4x128xf32>
    tpu.vector_store %arg7[%c0_13, %c0_14], %20 {strides = array<i32>} : memref<4x128xf32, #tpu.memory_space<vmem>>, vector<4x128xf32>,
    return
  }
  func.func @transform_0(%arg0: i32) -> (i32, i32) {
    %c0_i32 = arith.constant 0 : i32
    %c0_i32_0 = arith.constant 0 : i32
    return %arg0, %c0_i32 : i32, i32
  }
  func.func @transform_1(%arg0: i32) -> (i32, i32) {
    %c0_i32 = arith.constant 0 : i32
    %c0_i32_0 = arith.constant 0 : i32
    return %arg0, %c0_i32 : i32, i32
  }
  func.func @transform_2(%arg0: i32) -> (i32, i32) {
    %c0_i32 = arith.constant 0 : i32
    %c0_i32_0 = arith.constant 0 : i32
    %c0_i32_1 = arith.constant 0 : i32
    return %c0_i32, %c0_i32_0 : i32, i32
  }
  func.func @transform_3(%arg0: i32) -> (i32, i32) {
    %c0_i32 = arith.constant 0 : i32
    %c0_i32_0 = arith.constant 0 : i32
    %c0_i32_1 = arith.constant 0 : i32
    return %c0_i32, %c0_i32_0 : i32, i32
  }
  func.func @transform_4(%arg0: i32) -> (i32, i32) {
    %c0_i32 = arith.constant 0 : i32
    %c0_i32_0 = arith.constant 0 : i32
    %c0_i32_1 = arith.constant 0 : i32
    return %c0_i32, %c0_i32_0 : i32, i32
  }
  func.func @transform_5(%arg0: i32) -> (i32, i32) {
    %c0_i32 = arith.constant 0 : i32
    %c0_i32_0 = arith.constant 0 : i32
    %c0_i32_1 = arith.constant 0 : i32
    return %c0_i32, %c0_i32_0 : i32, i32
  }
  func.func @transform_6(%arg0: i32) -> (i32, i32) {
    %c0_i32 = arith.constant 0 : i32
    %c0_i32_0 = arith.constant 0 : i32
    return %arg0, %c0_i32 : i32, i32
  }
}

</mosaic_0001>

<llo_original>
// kernel: tpu_custom_call.1
$region0: #{tpu_custom_call.1}
  #allocation0 [shape = 'u32[]', space=smem, size = 0x4, offset = 0x4, fixed_abs, tag = 'smem constant byte address 0x4 - core index']
  #allocation1 [shape = 'u32[72,128]{1,0:T(1,128)}', space=vmem, size = 0x9000, scoped, tag = 'internal scratch']
  %s0 = inlined_call_operand.hbm [shape: f32[4,128], index: 0, kind: input, shape index: {}]
  %s1 = inlined_call_operand.hbm [shape: f32[4,128], index: 1, kind: input, shape index: {}]
  %s2 = inlined_call_operand.vmem [shape: f32[1,128], index: 2, kind: input, shape index: {}]
  %s3 = inlined_call_operand.vmem [shape: f32[1,128], index: 3, kind: input, shape index: {}]
  %s4 = inlined_call_operand.vmem [shape: f32[1,128], index: 4, kind: input, shape index: {}]
  %s5 = inlined_call_operand.hbm [shape: f32[128,128], index: 5, kind: input, shape index: {}]
  %s6 = inlined_call_operand.hbm [shape: f32[4,128], index: 6, kind: output, shape index: {}]
  %s7 = sld [smem:[#allocation0]]
  $region46: #{tpu_custom_call.1} parent=0
    _
  %s9 = ssub.s32 1, %s7
  %s10 = scalar_select 0, %s9, %s7
  $region1: #{tpu_custom_call.1} parent=0
    #allocation2 [shape = 'u8[2048]{0}', space=vmem, size = 0x800, scoped, tag = 'input window, operand 0, single buffered']
    #allocation3 [shape = 's32[1]{0}', space=sflag, size = 0x4, scoped, tag = 'scoped memory for tpu_custom_call.1']
    #allocation4 [shape = 's32[1]{0}', space=sflag, size = 0x4, scoped, tag = 'scoped memory for tpu_custom_call.1']
    #allocation5 [shape = 'u8[2048]{0}', space=vmem, size = 0x800, scoped, tag = 'input window, operand 1, single buffered']
    #allocation6 [shape = 's32[1]{0}', space=sflag, size = 0x4, scoped, tag = 'scoped memory for tpu_custom_call.1']
    #allocation7 [shape = 'u8[65536]{0}', space=vmem, size = 0x10000, scoped, tag = 'input window, operand 5, single buffered']
    #allocation8 [shape = 'u8[2048]{0}', space=vmem, size = 0x800, scoped, tag = 'output window, operand 0, single buffered']
    %11 = vsyncpa [#allocation3], 0
    %12 = vsyncpa [#allocation6], 0
    %13 = vsyncpa [#allocation4], 0
    // Predicated region
    $region2: #{tpu_custom_call.1} parent=1 // pred_check
      _
    $region3: #{tpu_custom_call.1} parent=1 // pred_check_branch
      %15 = sbr.rel (0) target = $region5
    $region4: #{tpu_custom_call.1} parent=1 // pred_region
      %17 = vsyncadd [#allocation3], 0
      %s19 = sshll.u32 %s0, 4
      %s20 = int_to_ptr.hbm [resolvable:$true] %s19
      %s21 = sshll.u32 [#allocation2], 4
      %s22 = int_to_ptr.vmem [resolvable:$true] %s21
      %24 = dma.hbm_to_vmem [thread:$0]  %s20, 64, %s22, [#allocation3]
    $region5: #{tpu_custom_call.1} parent=1 // pred_fallthru
      _
    // Predicated region
    $region6: #{tpu_custom_call.1} parent=1 // pred_check
      _
    $region7: #{tpu_custom_call.1} parent=1 // pred_check_branch
      %26 = sbr.rel (0) target = $region9
    $region8: #{tpu_custom_call.1} parent=1 // pred_region
      %28 = vsyncadd [#allocation6], 0
      %s30 = sshll.u32 %s1, 4
      %s31 = int_to_ptr.hbm [resolvable:$true] %s30
      %s32 = sshll.u32 [#allocation5], 4
      %s33 = int_to_ptr.vmem [resolvable:$true] %s32
      %35 = dma.hbm_to_vmem [thread:$0]  %s31, 64, %s33, [#allocation6]
    $region9: #{tpu_custom_call.1} parent=1 // pred_fallthru
      _
    // Predicated region
    $region10: #{tpu_custom_call.1} parent=1 // pred_check
      _
    $region11: #{tpu_custom_call.1} parent=1 // pred_check_branch
      %37 = sbr.rel (0) target = $region13
    $region12: #{tpu_custom_call.1} parent=1 // pred_region
      _
    $region13: #{tpu_custom_call.1} parent=1 // pred_fallthru
      _
    // Predicated region
    $region14: #{tpu_custom_call.1} parent=1 // pred_check
      _
    $region15: #{tpu_custom_call.1} parent=1 // pred_check_branch
      %39 = sbr.rel (0) target = $region17
    $region16: #{tpu_custom_call.1} parent=1 // pred_region
      _
    $region17: #{tpu_custom_call.1} parent=1 // pred_fallthru
      _
    // Predicated region
    $region18: #{tpu_custom_call.1} parent=1 // pred_check
      _
    $region19: #{tpu_custom_call.1} parent=1 // pred_check_branch
      %41 = sbr.rel (0) target = $region21
    $region20: #{tpu_custom_call.1} parent=1 // pred_region
      _
    $region21: #{tpu_custom_call.1} parent=1 // pred_fallthru
      _
    // Predicated region
    $region22: #{tpu_custom_call.1} parent=1 // pred_check
      _
    $region23: #{tpu_custom_call.1} parent=1 // pred_check_branch
      %43 = sbr.rel (0) target = $region25
    $region24: #{tpu_custom_call.1} parent=1 // pred_region
      %45 = vsyncadd [#allocation6], 0
      %s46 = sshll.u32 %s5, 4
      %s47 = int_to_ptr.hbm [resolvable:$true] %s46
      %s48 = sshll.u32 [#allocation7], 4
      %s49 = int_to_ptr.vmem [resolvable:$true] %s48
      %54 = dma.hbm_to_vmem [thread:$0]  %s47, 2048, %s49, [#allocation6], 128, 128, 8
    $region25: #{tpu_custom_call.1} parent=1 // pred_fallthru
      _
    // Predicated region
    $region26: #{tpu_custom_call.1} parent=1 // pred_check
      _
    $region27: #{tpu_custom_call.1} parent=1 // pred_check_branch
      %56 = sbr.rel (0) target = $region29
    $region28: #{tpu_custom_call.1} parent=1 // pred_region
      %58 = dma.done [#allocation3], 64
    $region29: #{tpu_custom_call.1} parent=1 // pred_fallthru
      _
    // Predicated region
    $region30: #{tpu_custom_call.1} parent=1 // pred_check
      _
    $region31: #{tpu_custom_call.1} parent=1 // pred_check_branch
      %60 = sbr.rel (0) target = $region33
    $region32: #{tpu_custom_call.1} parent=1 // pred_region
      %62 = dma.done [#allocation6], 64
    $region33: #{tpu_custom_call.1} parent=1 // pred_fallthru
      _
    // Predicated region
    $region34: #{tpu_custom_call.1} parent=1 // pred_check
      _
    $region35: #{tpu_custom_call.1} parent=1 // pred_check_branch
      %64 = sbr.rel (0) target = $region37
    $region36: #{tpu_custom_call.1} parent=1 // pred_region
      %66 = dma.done [#allocation6], 2048
    $region37: #{tpu_custom_call.1} parent=1 // pred_fallthru
      _
    %v67 = vld [vmem:[#allocation2] sm:$0xf]
    %v68 = vld [vmem:[#allocation5] sm:$0xf]
    %v69 = vld [vmem:[%s2] sm:$0x1]
    %v71 = vperm.slane %v69, 0
    %v73 = vmul.f32 %v68, %v71
    %v74 = vadd.f32 %v67, %v73
    %v75 = vld [vmem:[#allocation7] sm:$0xff]
    %v76 = vld [vmem:[#allocation7 + $0x8] sm:$0xff]
    %v77 = vld [vmem:[#allocation7 + $0x10] sm:$0xff]
    %v78 = vld [vmem:[#allocation7 + $0x18] sm:$0xff]
    %v79 = vld [vmem:[#allocation7 + $0x20] sm:$0xff]
    %v80 = vld [vmem:[#allocation7 + $0x28] sm:$0xff]
    %v81 = vld [vmem:[#allocation7 + $0x30] sm:$0xff]
    %v82 = vld [vmem:[#allocation7 + $0x38] sm:$0xff]
    %v83 = vld [vmem:[#allocation7 + $0x40] sm:$0xff]
    %v84 = vld [vmem:[#allocation7 + $0x48] sm:$0xff]
    %v85 = vld [vmem:[#allocation7 + $0x50] sm:$0xff]
    %v86 = vld [vmem:[#allocation7 + $0x58] sm:$0xff]
    %v87 = vld [vmem:[#allocation7 + $0x60] sm:$0xff]
    %v88 = vld [vmem:[#allocation7 + $0x68] sm:$0xff]
    %v89 = vld [vmem:[#allocation7 + $0x70] sm:$0xff]
    %v90 = vld [vmem:[#allocation7 + $0x78] sm:$0xff]
    %v91 = vand.u32 %v90, 4294901760
    %92 = vmatpush.msra.mxu0 %v91
    %v93 = vand.u32 %v89, 4294901760
    %94 = vmatpush.msra.mxu0 %v93
    %v95 = vand.u32 %v88, 4294901760
    %96 = vmatpush.msra.mxu0 %v95
    %v97 = vand.u32 %v87, 4294901760
    %98 = vmatpush.msra.mxu0 %v97
    %v99 = vand.u32 %v86, 4294901760
    %100 = vmatpush.msra.mxu0 %v99
    %v101 = vand.u32 %v85, 4294901760
    %102 = vmatpush.msra.mxu0 %v101
    %v103 = vand.u32 %v84, 4294901760
    %104 = vmatpush.msra.mxu0 %v103
    %v105 = vand.u32 %v83, 4294901760
    %106 = vmatpush.msra.mxu0 %v105
    %v107 = vand.u32 %v82, 4294901760
    %108 = vmatpush.msra.mxu0 %v107
    %v109 = vand.u32 %v81, 4294901760
    %110 = vmatpush.msra.mxu0 %v109
    %v111 = vand.u32 %v80, 4294901760
    %112 = vmatpush.msra.mxu0 %v111
    %v113 = vand.u32 %v79, 4294901760
    %114 = vmatpush.msra.mxu0 %v113
    %v115 = vand.u32 %v78, 4294901760
    %116 = vmatpush.msra.mxu0 %v115
    %v117 = vand.u32 %v77, 4294901760
    %118 = vmatpush.msra.mxu0 %v117
    %v119 = vand.u32 %v76, 4294901760
    %120 = vmatpush.msra.mxu0 %v119
    %v121 = vand.u32 %v75, 4294901760
    %122 = vmatpush.msra.mxu0 %v121
    %v123 = vand.u32 %v74, 4294901760
    %v124 = vsub.f32 %v74, %v123
    %v125 = vand.u32 %v124, 4294901760
    %v126 = vsub.f32 %v124, %v125
    %v127 = vand.u32 %v126, 4294901760
    %128 = vmatmul.f32.gmra.mxu0 %v127
    %v129 = vpop.f32.mrf.mxu0
    %v130 = vadd.f32 0.0, %v129
    %131 = vdwg.mxu0
    %v132 = vand.u32 %v90, 4294901760
    %v133 = vsub.f32 %v90, %v132
    %v134 = vand.u32 %v133, 4294901760
    %v135 = vsub.f32 %v133, %v134
    %v136 = vand.u32 %v135, 4294901760
    %137 = vmatpush.msra.mxu0 %v136
    %v138 = vand.u32 %v89, 4294901760
    %v139 = vsub.f32 %v89, %v138
    %v140 = vand.u32 %v139, 4294901760
    %v141 = vsub.f32 %v139, %v140
    %v142 = vand.u32 %v141, 4294901760
    %143 = vmatpush.msra.mxu0 %v142
    %v144 = vand.u32 %v88, 4294901760
    %v145 = vsub.f32 %v88, %v144
    %v146 = vand.u32 %v145, 4294901760
    %v147 = vsub.f32 %v145, %v146
    %v148 = vand.u32 %v147, 4294901760
    %149 = vmatpush.msra.mxu0 %v148
    %v150 = vand.u32 %v87, 4294901760
    %v151 = vsub.f32 %v87, %v150
    %v152 = vand.u32 %v151, 4294901760
    %v153 = vsub.f32 %v151, %v152
    %v154 = vand.u32 %v153, 4294901760
    %155 = vmatpush.msra.mxu0 %v154
    %v156 = vand.u32 %v86, 4294901760
    %v157 = vsub.f32 %v86, %v156
    %v158 = vand.u32 %v157, 4294901760
    %v159 = vsub.f32 %v157, %v158
    %v160 = vand.u32 %v159, 4294901760
    %161 = vmatpush.msra.mxu0 %v160
    %v162 = vand.u32 %v85, 4294901760
    %v163 = vsub.f32 %v85, %v162
    %v164 = vand.u32 %v163, 4294901760
    %v165 = vsub.f32 %v163, %v164
    %v166 = vand.u32 %v165, 4294901760
    %167 = vmatpush.msra.mxu0 %v166
    %v168 = vand.u32 %v84, 4294901760
    %v169 = vsub.f32 %v84, %v168
    %v170 = vand.u32 %v169, 4294901760
    %v171 = vsub.f32 %v169, %v170
    %v172 = vand.u32 %v171, 4294901760
    %173 = vmatpush.msra.mxu0 %v172
    %v174 = vand.u32 %v83, 4294901760
    %v175 = vsub.f32 %v83, %v174
    %v176 = vand.u32 %v175, 4294901760
    %v177 = vsub.f32 %v175, %v176
    %v178 = vand.u32 %v177, 4294901760
    %179 = vmatpush.msra.mxu0 %v178
    %v180 = vand.u32 %v82, 4294901760
    %v181 = vsub.f32 %v82, %v180
    %v182 = vand.u32 %v181, 4294901760
    %v183 = vsub.f32 %v181, %v182
    %v184 = vand.u32 %v183, 4294901760
    %185 = vmatpush.msra.mxu0 %v184
    %v186 = vand.u32 %v81, 4294901760
    %v187 = vsub.f32 %v81, %v186
    %v188 = vand.u32 %v187, 4294901760
    %v189 = vsub.f32 %v187, %v188
    %v190 = vand.u32 %v189, 4294901760
    %191 = vmatpush.msra.mxu0 %v190
    %v192 = vand.u32 %v80, 4294901760
    %v193 = vsub.f32 %v80, %v192
    %v194 = vand.u32 %v193, 4294901760
    %v195 = vsub.f32 %v193, %v194
    %v196 = vand.u32 %v195, 4294901760
    %197 = vmatpush.msra.mxu0 %v196
    %v198 = vand.u32 %v79, 4294901760
    %v199 = vsub.f32 %v79, %v198
    %v200 = vand.u32 %v199, 4294901760
    %v201 = vsub.f32 %v199, %v200
    %v202 = vand.u32 %v201, 4294901760
    %203 = vmatpush.msra.mxu0 %v202
    %v204 = vand.u32 %v78, 4294901760
    %v205 = vsub.f32 %v78, %v204
    %v206 = vand.u32 %v205, 4294901760
    %v207 = vsub.f32 %v205, %v206
    %v208 = vand.u32 %v207, 4294901760
    %209 = vmatpush.msra.mxu0 %v208
    %v210 = vand.u32 %v77, 4294901760
    %v211 = vsub.f32 %v77, %v210
    %v212 = vand.u32 %v211, 4294901760
    %v213 = vsub.f32 %v211, %v212
    %v214 = vand.u32 %v213, 4294901760
    %215 = vmatpush.msra.mxu0 %v214
    %v216 = vand.u32 %v76, 4294901760
    %v217 = vsub.f32 %v76, %v216
    %v218 = vand.u32 %v217, 4294901760
    %v219 = vsub.f32 %v217, %v218
    %v220 = vand.u32 %v219, 4294901760
    %221 = vmatpush.msra.mxu0 %v220
    %v222 = vand.u32 %v75, 4294901760
    %v223 = vsub.f32 %v75, %v222
    %v224 = vand.u32 %v223, 4294901760
    %v225 = vsub.f32 %v223, %v224
    %v226 = vand.u32 %v225, 4294901760
    %227 = vmatpush.msra.mxu0 %v226
    %v228 = vand.u32 %v74, 4294901760
    %229 = vmatmul.f32.gmra.mxu0 %v228
    %v230 = vpop.f32.mrf.mxu0
    %v231 = vadd.f32 %v130, %v230
    %232 = vdwg.mxu0
    %v233 = vand.u32 %v90, 4294901760
    %v234 = vsub.f32 %v90, %v233
    %235 = vmatpush.msra.mxu0 %v234
    %v236 = vand.u32 %v89, 4294901760
    %v237 = vsub.f32 %v89, %v236
    %238 = vmatpush.msra.mxu0 %v237
    %v239 = vand.u32 %v88, 4294901760
    %v240 = vsub.f32 %v88, %v239
    %241 = vmatpush.msra.mxu0 %v240
    %v242 = vand.u32 %v87, 4294901760
    %v243 = vsub.f32 %v87, %v242
    %244 = vmatpush.msra.mxu0 %v243
    %v245 = vand.u32 %v86, 4294901760
    %v246 = vsub.f32 %v86, %v245
    %247 = vmatpush.msra.mxu0 %v246
    %v248 = vand.u32 %v85, 4294901760
    %v249 = vsub.f32 %v85, %v248
    %250 = vmatpush.msra.mxu0 %v249
    %v251 = vand.u32 %v84, 4294901760
    %v252 = vsub.f32 %v84, %v251
    %253 = vmatpush.msra.mxu0 %v252
    %v254 = vand.u32 %v83, 4294901760
    %v255 = vsub.f32 %v83, %v254
    %256 = vmatpush.msra.mxu0 %v255
    %v257 = vand.u32 %v82, 4294901760
    %v258 = vsub.f32 %v82, %v257
    %259 = vmatpush.msra.mxu0 %v258
    %v260 = vand.u32 %v81, 4294901760
    %v261 = vsub.f32 %v81, %v260
    %262 = vmatpush.msra.mxu0 %v261
    %v263 = vand.u32 %v80, 4294901760
    %v264 = vsub.f32 %v80, %v263
    %265 = vmatpush.msra.mxu0 %v264
    %v266 = vand.u32 %v79, 4294901760
    %v267 = vsub.f32 %v79, %v266
    %268 = vmatpush.msra.mxu0 %v267
    %v269 = vand.u32 %v78, 4294901760
    %v270 = vsub.f32 %v78, %v269
    %271 = vmatpush.msra.mxu0 %v270
    %v272 = vand.u32 %v77, 4294901760
    %v273 = vsub.f32 %v77, %v272
    %274 = vmatpush.msra.mxu0 %v273
    %v275 = vand.u32 %v76, 4294901760
    %v276 = vsub.f32 %v76, %v275
    %277 = vmatpush.msra.mxu0 %v276
    %v278 = vand.u32 %v75, 4294901760
    %v279 = vsub.f32 %v75, %v278
    %280 = vmatpush.msra.mxu0 %v279
    %v281 = vand.u32 %v74, 4294901760
    %v282 = vsub.f32 %v74, %v281
    %283 = vmatmul.f32.gmra.mxu0 %v282
    %v284 = vpop.f32.mrf.mxu0
    %v285 = vadd.f32 %v231, %v284
    %286 = vdwg.mxu0
    %v287 = vand.u32 %v90, 4294901760
    %288 = vmatpush.msra.mxu0 %v287
    %v289 = vand.u32 %v89, 4294901760
    %290 = vmatpush.msra.mxu0 %v289
    %v291 = vand.u32 %v88, 4294901760
    %292 = vmatpush.msra.mxu0 %v291
    %v293 = vand.u32 %v87, 4294901760
    %294 = vmatpush.msra.mxu0 %v293
    %v295 = vand.u32 %v86, 4294901760
    %296 = vmatpush.msra.mxu0 %v295
    %v297 = vand.u32 %v85, 4294901760
    %298 = vmatpush.msra.mxu0 %v297
    %v299 = vand.u32 %v84, 4294901760
    %300 = vmatpush.msra.mxu0 %v299
    %v301 = vand.u32 %v83, 4294901760
    %302 = vmatpush.msra.mxu0 %v301
    %v303 = vand.u32 %v82, 4294901760
    %304 = vmatpush.msra.mxu0 %v303
    %v305 = vand.u32 %v81, 4294901760
    %306 = vmatpush.msra.mxu0 %v305
    %v307 = vand.u32 %v80, 4294901760
    %308 = vmatpush.msra.mxu0 %v307
    %v309 = vand.u32 %v79, 4294901760
    %310 = vmatpush.msra.mxu0 %v309
    %v311 = vand.u32 %v78, 4294901760
    %312 = vmatpush.msra.mxu0 %v311
    %v313 = vand.u32 %v77, 4294901760
    %314 = vmatpush.msra.mxu0 %v313
    %v315 = vand.u32 %v76, 4294901760
    %316 = vmatpush.msra.mxu0 %v315
    %v317 = vand.u32 %v75, 4294901760
    %318 = vmatpush.msra.mxu0 %v317
    %v319 = vand.u32 %v74, 4294901760
    %v320 = vsub.f32 %v74, %v319
    %v321 = vand.u32 %v320, 4294901760
    %322 = vmatmul.f32.gmra.mxu0 %v321
    %v323 = vpop.f32.mrf.mxu0
    %v324 = vadd.f32 %v285, %v323
    %325 = vdwg.mxu0
    %v326 = vand.u32 %v90, 4294901760
    %v327 = vsub.f32 %v90, %v326
    %v328 = vand.u32 %v327, 4294901760
    %329 = vmatpush.msra.mxu0 %v328
    %v330 = vand.u32 %v89, 4294901760
    %v331 = vsub.f32 %v89, %v330
    %v332 = vand.u32 %v331, 4294901760
    %333 = vmatpush.msra.mxu0 %v332
    %v334 = vand.u32 %v88, 4294901760
    %v335 = vsub.f32 %v88, %v334
    %v336 = vand.u32 %v335, 4294901760
    %337 = vmatpush.msra.mxu0 %v336
    %v338 = vand.u32 %v87, 4294901760
    %v339 = vsub.f32 %v87, %v338
    %v340 = vand.u32 %v339, 4294901760
    %341 = vmatpush.msra.mxu0 %v340
    %v342 = vand.u32 %v86, 4294901760
    %v343 = vsub.f32 %v86, %v342
    %v344 = vand.u32 %v343, 4294901760
    %345 = vmatpush.msra.mxu0 %v344
    %v346 = vand.u32 %v85, 4294901760
    %v347 = vsub.f32 %v85, %v346
    %v348 = vand.u32 %v347, 4294901760
    %349 = vmatpush.msra.mxu0 %v348
    %v350 = vand.u32 %v84, 4294901760
    %v351 = vsub.f32 %v84, %v350
    %v352 = vand.u32 %v351, 4294901760
    %353 = vmatpush.msra.mxu0 %v352
    %v354 = vand.u32 %v83, 4294901760
    %v355 = vsub.f32 %v83, %v354
    %v356 = vand.u32 %v355, 4294901760
    %357 = vmatpush.msra.mxu0 %v356
    %v358 = vand.u32 %v82, 4294901760
    %v359 = vsub.f32 %v82, %v358
    %v360 = vand.u32 %v359, 4294901760
    %361 = vmatpush.msra.mxu0 %v360
    %v362 = vand.u32 %v81, 4294901760
    %v363 = vsub.f32 %v81, %v362
    %v364 = vand.u32 %v363, 4294901760
    %365 = vmatpush.msra.mxu0 %v364
    %v366 = vand.u32 %v80, 4294901760
    %v367 = vsub.f32 %v80, %v366
    %v368 = vand.u32 %v367, 4294901760
    %369 = vmatpush.msra.mxu0 %v368
    %v370 = vand.u32 %v79, 4294901760
    %v371 = vsub.f32 %v79, %v370
    %v372 = vand.u32 %v371, 4294901760
    %373 = vmatpush.msra.mxu0 %v372
    %v374 = vand.u32 %v78, 4294901760
    %v375 = vsub.f32 %v78, %v374
    %v376 = vand.u32 %v375, 4294901760
    %377 = vmatpush.msra.mxu0 %v376
    %v378 = vand.u32 %v77, 4294901760
    %v379 = vsub.f32 %v77, %v378
    %v380 = vand.u32 %v379, 4294901760
    %381 = vmatpush.msra.mxu0 %v380
    %v382 = vand.u32 %v76, 4294901760
    %v383 = vsub.f32 %v76, %v382
    %v384 = vand.u32 %v383, 4294901760
    %385 = vmatpush.msra.mxu0 %v384
    %v386 = vand.u32 %v75, 4294901760
    %v387 = vsub.f32 %v75, %v386
    %v388 = vand.u32 %v387, 4294901760
    %389 = vmatpush.msra.mxu0 %v388
    %v390 = vand.u32 %v74, 4294901760
    %391 = vmatmul.f32.gmra.mxu0 %v390
    %v392 = vpop.f32.mrf.mxu0
    %v393 = vadd.f32 %v324, %v392
    %394 = vdwg.mxu0
    %v395 = vand.u32 %v90, 4294901760
    %396 = vmatpush.msra.mxu0 %v395
    %v397 = vand.u32 %v89, 4294901760
    %398 = vmatpush.msra.mxu0 %v397
    %v399 = vand.u32 %v88, 4294901760
    %400 = vmatpush.msra.mxu0 %v399
    %v401 = vand.u32 %v87, 4294901760
    %402 = vmatpush.msra.mxu0 %v401
    %v403 = vand.u32 %v86, 4294901760
    %404 = vmatpush.msra.mxu0 %v403
    %v405 = vand.u32 %v85, 4294901760
    %406 = vmatpush.msra.mxu0 %v405
    %v407 = vand.u32 %v84, 4294901760
    %408 = vmatpush.msra.mxu0 %v407
    %v409 = vand.u32 %v83, 4294901760
    %410 = vmatpush.msra.mxu0 %v409
    %v411 = vand.u32 %v82, 4294901760
    %412 = vmatpush.msra.mxu0 %v411
    %v413 = vand.u32 %v81, 4294901760
    %414 = vmatpush.msra.mxu0 %v413
    %v415 = vand.u32 %v80, 4294901760
    %416 = vmatpush.msra.mxu0 %v415
    %v417 = vand.u32 %v79, 4294901760
    %418 = vmatpush.msra.mxu0 %v417
    %v419 = vand.u32 %v78, 4294901760
    %420 = vmatpush.msra.mxu0 %v419
    %v421 = vand.u32 %v77, 4294901760
    %422 = vmatpush.msra.mxu0 %v421
    %v423 = vand.u32 %v76, 4294901760
    %424 = vmatpush.msra.mxu0 %v423
    %v425 = vand.u32 %v75, 4294901760
    %426 = vmatpush.msra.mxu0 %v425
    %v427 = vand.u32 %v74, 4294901760
    %428 = vmatmul.f32.gmra.mxu0 %v427
    %v429 = vpop.f32.mrf.mxu0
    %v430 = vadd.f32 %v393, %v429
    %431 = vdwg.mxu0
    %v432 = vsub.f32 %v74, %v430
    %v433 = vmul.f32 %v432, %v432
    %v434 = vand.u32 %v90, 4294901760
    %435 = vmatpush.msra.mxu0 %v434
    %v436 = vand.u32 %v89, 4294901760
    %437 = vmatpush.msra.mxu0 %v436
    %v438 = vand.u32 %v88, 4294901760
    %439 = vmatpush.msra.mxu0 %v438
    %v440 = vand.u32 %v87, 4294901760
    %441 = vmatpush.msra.mxu0 %v440
    %v442 = vand.u32 %v86, 4294901760
    %443 = vmatpush.msra.mxu0 %v442
    %v444 = vand.u32 %v85, 4294901760
    %445 = vmatpush.msra.mxu0 %v444
    %v446 = vand.u32 %v84, 4294901760
    %447 = vmatpush.msra.mxu0 %v446
    %v448 = vand.u32 %v83, 4294901760
    %449 = vmatpush.msra.mxu0 %v448
    %v450 = vand.u32 %v82, 4294901760
    %451 = vmatpush.msra.mxu0 %v450
    %v452 = vand.u32 %v81, 4294901760
    %453 = vmatpush.msra.mxu0 %v452
    %v454 = vand.u32 %v80, 4294901760
    %455 = vmatpush.msra.mxu0 %v454
    %v456 = vand.u32 %v79, 4294901760
    %457 = vmatpush.msra.mxu0 %v456
    %v458 = vand.u32 %v78, 4294901760
    %459 = vmatpush.msra.mxu0 %v458
    %v460 = vand.u32 %v77, 4294901760
    %461 = vmatpush.msra.mxu0 %v460
    %v462 = vand.u32 %v76, 4294901760
    %463 = vmatpush.msra.mxu0 %v462
    %v464 = vand.u32 %v75, 4294901760
    %465 = vmatpush.msra.mxu0 %v464
    %v466 = vand.u32 %v433, 4294901760
    %v467 = vsub.f32 %v433, %v466
    %v468 = vand.u32 %v467, 4294901760
    %v469 = vsub.f32 %v467, %v468
    %v470 = vand.u32 %v469, 4294901760
    %471 = vmatmul.f32.gmra.mxu0 %v470
    %v472 = vpop.f32.mrf.mxu0
    %v473 = vadd.f32 1e-05, %v472
    %474 = vdwg.mxu0
    %v475 = vand.u32 %v90, 4294901760
    %v476 = vsub.f32 %v90, %v475
    %v477 = vand.u32 %v476, 4294901760
    %v478 = vsub.f32 %v476, %v477
    %v479 = vand.u32 %v478, 4294901760
    %480 = vmatpush.msra.mxu0 %v479
    %v481 = vand.u32 %v89, 4294901760
    %v482 = vsub.f32 %v89, %v481
    %v483 = vand.u32 %v482, 4294901760
    %v484 = vsub.f32 %v482, %v483
    %v485 = vand.u32 %v484, 4294901760
    %486 = vmatpush.msra.mxu0 %v485
    %v487 = vand.u32 %v88, 4294901760
    %v488 = vsub.f32 %v88, %v487
    %v489 = vand.u32 %v488, 4294901760
    %v490 = vsub.f32 %v488, %v489
    %v491 = vand.u32 %v490, 4294901760
    %492 = vmatpush.msra.mxu0 %v491
    %v493 = vand.u32 %v87, 4294901760
    %v494 = vsub.f32 %v87, %v493
    %v495 = vand.u32 %v494, 4294901760
    %v496 = vsub.f32 %v494, %v495
    %v497 = vand.u32 %v496, 4294901760
    %498 = vmatpush.msra.mxu0 %v497
    %v499 = vand.u32 %v86, 4294901760
    %v500 = vsub.f32 %v86, %v499
    %v501 = vand.u32 %v500, 4294901760
    %v502 = vsub.f32 %v500, %v501
    %v503 = vand.u32 %v502, 4294901760
    %504 = vmatpush.msra.mxu0 %v503
    %v505 = vand.u32 %v85, 4294901760
    %v506 = vsub.f32 %v85, %v505
    %v507 = vand.u32 %v506, 4294901760
    %v508 = vsub.f32 %v506, %v507
    %v509 = vand.u32 %v508, 4294901760
    %510 = vmatpush.msra.mxu0 %v509
    %v511 = vand.u32 %v84, 4294901760
    %v512 = vsub.f32 %v84, %v511
    %v513 = vand.u32 %v512, 4294901760
    %v514 = vsub.f32 %v512, %v513
    %v515 = vand.u32 %v514, 4294901760
    %516 = vmatpush.msra.mxu0 %v515
    %v517 = vand.u32 %v83, 4294901760
    %v518 = vsub.f32 %v83, %v517
    %v519 = vand.u32 %v518, 4294901760
    %v520 = vsub.f32 %v518, %v519
    %v521 = vand.u32 %v520, 4294901760
    %522 = vmatpush.msra.mxu0 %v521
    %v523 = vand.u32 %v82, 4294901760
    %v524 = vsub.f32 %v82, %v523
    %v525 = vand.u32 %v524, 4294901760
    %v526 = vsub.f32 %v524, %v525
    %v527 = vand.u32 %v526, 4294901760
    %528 = vmatpush.msra.mxu0 %v527
    %v529 = vand.u32 %v81, 4294901760
    %v530 = vsub.f32 %v81, %v529
    %v531 = vand.u32 %v530, 4294901760
    %v532 = vsub.f32 %v530, %v531
    %v533 = vand.u32 %v532, 4294901760
    %534 = vmatpush.msra.mxu0 %v533
    %v535 = vand.u32 %v80, 4294901760
    %v536 = vsub.f32 %v80, %v535
    %v537 = vand.u32 %v536, 4294901760
    %v538 = vsub.f32 %v536, %v537
    %v539 = vand.u32 %v538, 4294901760
    %540 = vmatpush.msra.mxu0 %v539
    %v541 = vand.u32 %v79, 4294901760
    %v542 = vsub.f32 %v79, %v541
    %v543 = vand.u32 %v542, 4294901760
    %v544 = vsub.f32 %v542, %v543
    %v545 = vand.u32 %v544, 4294901760
    %546 = vmatpush.msra.mxu0 %v545
    %v547 = vand.u32 %v78, 4294901760
    %v548 = vsub.f32 %v78, %v547
    %v549 = vand.u32 %v548, 4294901760
    %v550 = vsub.f32 %v548, %v549
    %v551 = vand.u32 %v550, 4294901760
    %552 = vmatpush.msra.mxu0 %v551
    %v553 = vand.u32 %v77, 4294901760
    %v554 = vsub.f32 %v77, %v553
    %v555 = vand.u32 %v554, 4294901760
    %v556 = vsub.f32 %v554, %v555
    %v557 = vand.u32 %v556, 4294901760
    %558 = vmatpush.msra.mxu0 %v557
    %v559 = vand.u32 %v76, 4294901760
    %v560 = vsub.f32 %v76, %v559
    %v561 = vand.u32 %v560, 4294901760
    %v562 = vsub.f32 %v560, %v561
    %v563 = vand.u32 %v562, 4294901760
    %564 = vmatpush.msra.mxu0 %v563
    %v565 = vand.u32 %v75, 4294901760
    %v566 = vsub.f32 %v75, %v565
    %v567 = vand.u32 %v566, 4294901760
    %v568 = vsub.f32 %v566, %v567
    %v569 = vand.u32 %v568, 4294901760
    %570 = vmatpush.msra.mxu0 %v569
    %v571 = vand.u32 %v433, 4294901760
    %572 = vmatmul.f32.gmra.mxu0 %v571
    %v573 = vpop.f32.mrf.mxu0
    %v574 = vadd.f32 %v473, %v573
    %575 = vdwg.mxu0
    %v576 = vand.u32 %v90, 4294901760
    %v577 = vsub.f32 %v90, %v576
    %578 = vmatpush.msra.mxu0 %v577
    %v579 = vand.u32 %v89, 4294901760
    %v580 = vsub.f32 %v89, %v579
    %581 = vmatpush.msra.mxu0 %v580
    %v582 = vand.u32 %v88, 4294901760
    %v583 = vsub.f32 %v88, %v582
    %584 = vmatpush.msra.mxu0 %v583
    %v585 = vand.u32 %v87, 4294901760
    %v586 = vsub.f32 %v87, %v585
    %587 = vmatpush.msra.mxu0 %v586
    %v588 = vand.u32 %v86, 4294901760
    %v589 = vsub.f32 %v86, %v588
    %590 = vmatpush.msra.mxu0 %v589
    %v591 = vand.u32 %v85, 4294901760
    %v592 = vsub.f32 %v85, %v591
    %593 = vmatpush.msra.mxu0 %v592
    %v594 = vand.u32 %v84, 4294901760
    %v595 = vsub.f32 %v84, %v594
    %596 = vmatpush.msra.mxu0 %v595
    %v597 = vand.u32 %v83, 4294901760
    %v598 = vsub.f32 %v83, %v597
    %599 = vmatpush.msra.mxu0 %v598
    %v600 = vand.u32 %v82, 4294901760
    %v601 = vsub.f32 %v82, %v600
    %602 = vmatpush.msra.mxu0 %v601
    %v603 = vand.u32 %v81, 4294901760
    %v604 = vsub.f32 %v81, %v603
    %605 = vmatpush.msra.mxu0 %v604
    %v606 = vand.u32 %v80, 4294901760
    %v607 = vsub.f32 %v80, %v606
    %608 = vmatpush.msra.mxu0 %v607
    %v609 = vand.u32 %v79, 4294901760
    %v610 = vsub.f32 %v79, %v609
    %611 = vmatpush.msra.mxu0 %v610
    %v612 = vand.u32 %v78, 4294901760
    %v613 = vsub.f32 %v78, %v612
    %614 = vmatpush.msra.mxu0 %v613
    %v615 = vand.u32 %v77, 4294901760
    %v616 = vsub.f32 %v77, %v615
    %617 = vmatpush.msra.mxu0 %v616
    %v618 = vand.u32 %v76, 4294901760
    %v619 = vsub.f32 %v76, %v618
    %620 = vmatpush.msra.mxu0 %v619
    %v621 = vand.u32 %v75, 4294901760
    %v622 = vsub.f32 %v75, %v621
    %623 = vmatpush.msra.mxu0 %v622
    %v624 = vand.u32 %v433, 4294901760
    %v625 = vsub.f32 %v433, %v624
    %626 = vmatmul.f32.gmra.mxu0 %v625
    %v627 = vpop.f32.mrf.mxu0
    %v628 = vadd.f32 %v574, %v627
    %629 = vdwg.mxu0
    %v630 = vand.u32 %v90, 4294901760
    %631 = vmatpush.msra.mxu0 %v630
    %v632 = vand.u32 %v89, 4294901760
    %633 = vmatpush.msra.mxu0 %v632
    %v634 = vand.u32 %v88, 4294901760
    %635 = vmatpush.msra.mxu0 %v634
    %v636 = vand.u32 %v87, 4294901760
    %637 = vmatpush.msra.mxu0 %v636
    %v638 = vand.u32 %v86, 4294901760
    %639 = vmatpush.msra.mxu0 %v638
    %v640 = vand.u32 %v85, 4294901760
    %641 = vmatpush.msra.mxu0 %v640
    %v642 = vand.u32 %v84, 4294901760
    %643 = vmatpush.msra.mxu0 %v642
    %v644 = vand.u32 %v83, 4294901760
    %645 = vmatpush.msra.mxu0 %v644
    %v646 = vand.u32 %v82, 4294901760
    %647 = vmatpush.msra.mxu0 %v646
    %v648 = vand.u32 %v81, 4294901760
    %649 = vmatpush.msra.mxu0 %v648
    %v650 = vand.u32 %v80, 4294901760
    %651 = vmatpush.msra.mxu0 %v650
    %v652 = vand.u32 %v79, 4294901760
    %653 = vmatpush.msra.mxu0 %v652
    %v654 = vand.u32 %v78, 4294901760
    %655 = vmatpush.msra.mxu0 %v654
    %v656 = vand.u32 %v77, 4294901760
    %657 = vmatpush.msra.mxu0 %v656
    %v658 = vand.u32 %v76, 4294901760
    %659 = vmatpush.msra.mxu0 %v658
    %v660 = vand.u32 %v75, 4294901760
    %661 = vmatpush.msra.mxu0 %v660
    %v662 = vand.u32 %v433, 4294901760
    %v663 = vsub.f32 %v433, %v662
    %v664 = vand.u32 %v663, 4294901760
    %665 = vmatmul.f32.gmra.mxu0 %v664
    %v666 = vpop.f32.mrf.mxu0
    %v667 = vadd.f32 %v628, %v666
    %668 = vdwg.mxu0
    %v669 = vand.u32 %v90, 4294901760
    %v670 = vsub.f32 %v90, %v669
    %v671 = vand.u32 %v670, 4294901760
    %672 = vmatpush.msra.mxu0 %v671
    %v673 = vand.u32 %v89, 4294901760
    %v674 = vsub.f32 %v89, %v673
    %v675 = vand.u32 %v674, 4294901760
    %676 = vmatpush.msra.mxu0 %v675
    %v677 = vand.u32 %v88, 4294901760
    %v678 = vsub.f32 %v88, %v677
    %v679 = vand.u32 %v678, 4294901760
    %680 = vmatpush.msra.mxu0 %v679
    %v681 = vand.u32 %v87, 4294901760
    %v682 = vsub.f32 %v87, %v681
    %v683 = vand.u32 %v682, 4294901760
    %684 = vmatpush.msra.mxu0 %v683
    %v685 = vand.u32 %v86, 4294901760
    %v686 = vsub.f32 %v86, %v685
    %v687 = vand.u32 %v686, 4294901760
    %688 = vmatpush.msra.mxu0 %v687
    %v689 = vand.u32 %v85, 4294901760
    %v690 = vsub.f32 %v85, %v689
    %v691 = vand.u32 %v690, 4294901760
    %692 = vmatpush.msra.mxu0 %v691
    %v693 = vand.u32 %v84, 4294901760
    %v694 = vsub.f32 %v84, %v693
    %v695 = vand.u32 %v694, 4294901760
    %696 = vmatpush.msra.mxu0 %v695
    %v697 = vand.u32 %v83, 4294901760
    %v698 = vsub.f32 %v83, %v697
    %v699 = vand.u32 %v698, 4294901760
    %700 = vmatpush.msra.mxu0 %v699
    %v701 = vand.u32 %v82, 4294901760
    %v702 = vsub.f32 %v82, %v701
    %v703 = vand.u32 %v702, 4294901760
    %704 = vmatpush.msra.mxu0 %v703
    %v705 = vand.u32 %v81, 4294901760
    %v706 = vsub.f32 %v81, %v705
    %v707 = vand.u32 %v706, 4294901760
    %708 = vmatpush.msra.mxu0 %v707
    %v709 = vand.u32 %v80, 4294901760
    %v710 = vsub.f32 %v80, %v709
    %v711 = vand.u32 %v710, 4294901760
    %712 = vmatpush.msra.mxu0 %v711
    %v713 = vand.u32 %v79, 4294901760
    %v714 = vsub.f32 %v79, %v713
    %v715 = vand.u32 %v714, 4294901760
    %716 = vmatpush.msra.mxu0 %v715
    %v717 = vand.u32 %v78, 4294901760
    %v718 = vsub.f32 %v78, %v717
    %v719 = vand.u32 %v718, 4294901760
    %720 = vmatpush.msra.mxu0 %v719
    %v721 = vand.u32 %v77, 4294901760
    %v722 = vsub.f32 %v77, %v721
    %v723 = vand.u32 %v722, 4294901760
    %724 = vmatpush.msra.mxu0 %v723
    %v725 = vand.u32 %v76, 4294901760
    %v726 = vsub.f32 %v76, %v725
    %v727 = vand.u32 %v726, 4294901760
    %728 = vmatpush.msra.mxu0 %v727
    %v729 = vand.u32 %v75, 4294901760
    %v730 = vsub.f32 %v75, %v729
    %v731 = vand.u32 %v730, 4294901760
    %732 = vmatpush.msra.mxu0 %v731
    %v733 = vand.u32 %v433, 4294901760
    %734 = vmatmul.f32.gmra.mxu0 %v733
    %v735 = vpop.f32.mrf.mxu0
    %v736 = vadd.f32 %v667, %v735
    %737 = vdwg.mxu0
    %v738 = vand.u32 %v90, 4294901760
    %739 = vmatpush.msra.mxu0 %v738
    %v740 = vand.u32 %v89, 4294901760
    %741 = vmatpush.msra.mxu0 %v740
    %v742 = vand.u32 %v88, 4294901760
    %743 = vmatpush.msra.mxu0 %v742
    %v744 = vand.u32 %v87, 4294901760
    %745 = vmatpush.msra.mxu0 %v744
    %v746 = vand.u32 %v86, 4294901760
    %747 = vmatpush.msra.mxu0 %v746
    %v748 = vand.u32 %v85, 4294901760
    %749 = vmatpush.msra.mxu0 %v748
    %v750 = vand.u32 %v84, 4294901760
    %751 = vmatpush.msra.mxu0 %v750
    %v752 = vand.u32 %v83, 4294901760
    %753 = vmatpush.msra.mxu0 %v752
    %v754 = vand.u32 %v82, 4294901760
    %755 = vmatpush.msra.mxu0 %v754
    %v756 = vand.u32 %v81, 4294901760
    %757 = vmatpush.msra.mxu0 %v756
    %v758 = vand.u32 %v80, 4294901760
    %759 = vmatpush.msra.mxu0 %v758
    %v760 = vand.u32 %v79, 4294901760
    %761 = vmatpush.msra.mxu0 %v760
    %v762 = vand.u32 %v78, 4294901760
    %763 = vmatpush.msra.mxu0 %v762
    %v764 = vand.u32 %v77, 4294901760
    %765 = vmatpush.msra.mxu0 %v764
    %v766 = vand.u32 %v76, 4294901760
    %767 = vmatpush.msra.mxu0 %v766
    %v768 = vand.u32 %v75, 4294901760
    %769 = vmatpush.msra.mxu0 %v768
    %v770 = vand.u32 %v433, 4294901760
    %771 = vmatmul.f32.gmra.mxu0 %v770
    %v772 = vpop.f32.mrf.mxu0
    %v773 = vadd.f32 %v736, %v772
    %774 = vdwg.mxu0
    %v775 = vrsqrt.pop %v773
    %v776 = vmul.f32 %v775, %v773
    %v777 = vmul.f32 %v776, %v775
    %v778 = vmul.f32 0.5, %v777
    %v779 = vsub.f32 1.5, %v778
    %v780 = vmul.f32 %v775, %v779
    %vm781 = vweird.f32 %v773
    %vm782 = vweird.f32 %v775
    %vm783 = vmor %vm781, %vm782
    %v784 = vsel %vm783, %v775, %v780
    %v785 = vmul.f32 %v432, %v784
    %v786 = vld [vmem:[%s3] sm:$0x1]
    %v788 = vperm.slane %v786, 0
    %v790 = vmul.f32 %v785, %v788
    %v791 = vld [vmem:[%s4] sm:$0x1]
    %v793 = vperm.slane %v791, 0
    %v795 = vadd.f32 %v790, %v793
    %796 = vst [vmem:[#allocation8] sm:$0xf] %v795
    // Predicated region
    $region38: #{tpu_custom_call.1} parent=1 // pred_check
      _
    $region39: #{tpu_custom_call.1} parent=1 // pred_check_branch
      %798 = sbr.rel (0) target = $region41
    $region40: #{tpu_custom_call.1} parent=1 // pred_region
      %800 = vsyncadd [#allocation4], 0
      %s802 = sshll.u32 [#allocation8], 4
      %s803 = int_to_ptr.vmem [resolvable:$true] %s802
      %s804 = sshll.u32 %s6, 4
      %s805 = int_to_ptr.hbm [resolvable:$true] %s804
      %807 = dma.vmem_to_hbm [thread:$0]  %s803, 64, %s805, [#allocation4]
    $region41: #{tpu_custom_call.1} parent=1 // pred_fallthru
      _
    // Predicated region
    $region42: #{tpu_custom_call.1} parent=1 // pred_check
      _
    $region43: #{tpu_custom_call.1} parent=1 // pred_check_branch
      %809 = sbr.rel (0) target = $region45
    $region44: #{tpu_custom_call.1} parent=1 // pred_region
      %811 = dma.done [#allocation4], 64
    $region45: #{tpu_custom_call.1} parent=1 // pred_fallthru
      _
    %812 = vsyncpa [#allocation3], 1
    %813 = vsyncpa [#allocation6], 1
    %814 = vsyncpa [#allocation4], 1

</llo_original>
